<compile_context>
chip_gen: v7x
topology: tpu7x:2x2x1
jax: 0.10.0
libtpu: 0.0.40
codegen_flags: <defaults>
</compile_context>

<pallas_src>
import functools

import jax
import jax.numpy as jnp
from jax import lax
from jax.experimental import pallas as pl
from jax.experimental.pallas import tpu as pltpu


# ----------------------------------------------------------------------------
# hardware-derived knobs
# ----------------------------------------------------------------------------
def _vmem_capacity_bytes():
    try:
        return int(pltpu.get_tpu_info().vmem_capacity_bytes)
    except Exception:
        return 128 * 1024 * 1024


def _gate_dtype():
    # bf16 tanh on v6e/v7x (bf16 EUP); f32 on v5e (no bf16 EUP/VPU).
    try:
        kind = jax.devices()[0].device_kind.lower()
    except Exception:
        return jnp.bfloat16
    if "v5 lite" in kind or "v5e" in kind or "v5lite" in kind:
        return jnp.float32
    return jnp.bfloat16


def _round_up(x, m):
    return ((x + m - 1) // m) * m


# ----------------------------------------------------------------------------
# Kernel 1: per-head normalized MLP projection, computed ONCE per hop.
# grid = (n_heads, n_node_tiles); output (H, N_pad, HID_pad) bf16.
# ----------------------------------------------------------------------------
def _proj_kernel(feat_ref, w1_ref, b1_ref, w2_ref, b2_ref, proj_ref):
    # Linear -> ReLU -> Linear (bf16 MXU operands, f32 accumulate).
    hid = jnp.dot(feat_ref[...], w1_ref[...],
                  preferred_element_type=jnp.float32) + b1_ref[...]
    hid = jnp.maximum(hid, 0.0).astype(jnp.bfloat16)
    proj = jnp.dot(hid, w2_ref[...],
                   preferred_element_type=jnp.float32) + b2_ref[...]
    # F.normalize-style: 1 / max(||proj||, 1e-12)  ==  rsqrt(max(sum_sq, 1e-24))
    inv_norm = lax.rsqrt(
        jnp.maximum(jnp.sum(proj * proj, axis=-1, keepdims=True), 1e-24))
    proj_ref[...] = (proj * inv_norm).astype(jnp.bfloat16)


def _proj_call(feat_bf, w1_bf, b1, w2_bf, b2, *, q_block, vmem_limit):
    n_heads, d_pad, hid_pad = w1_bf.shape
    n_pad = feat_bf.shape[0]
    n_k = n_pad // q_block
    return pl.pallas_call(
        _proj_kernel,
        out_shape=jax.ShapeDtypeStruct((n_heads, n_pad, hid_pad), jnp.bfloat16),
        grid_spec=pltpu.PrefetchScalarGridSpec(
            num_scalar_prefetch=0,
            grid=(n_heads, n_k),
            in_specs=[
                pl.BlockSpec((q_block, d_pad), lambda h, k: (k, 0)),
                pl.BlockSpec((None, d_pad, hid_pad), lambda h, k: (h, 0, 0)),
                pl.BlockSpec((None, 1, hid_pad), lambda h, k: (h, 0, 0)),
                pl.BlockSpec((None, hid_pad, hid_pad), lambda h, k: (h, 0, 0)),
                pl.BlockSpec((None, 1, hid_pad), lambda h, k: (h, 0, 0)),
            ],
            out_specs=pl.BlockSpec((None, q_block, hid_pad),
                                   lambda h, k: (h, k, 0)),
        ),
        compiler_params=pltpu.CompilerParams(
            dimension_semantics=("parallel", "parallel"),
            vmem_limit_bytes=vmem_limit),
    )(feat_bf, w1_bf, b1, w2_bf, b2)


# ----------------------------------------------------------------------------
# Kernel 2: one propagation hop.
# grid = (n_q_tiles, n_heads); output tile is a resident head accumulator.
# ----------------------------------------------------------------------------
def _hop_kernel(feat_ref, ori_ref, adj_ref, proj_ref, out_ref, *,
                keep_ratio, inv_temp, n_heads, q_block, gate_dtype):
    head = pl.program_id(1)

    # The keep_ratio * ori residual is head-invariant: write it once per q-tile.
    @pl.when(head == 0)
    def _():
        out_ref[...] = keep_ratio * ori_ref[...]

    # Cached per-head key projections (full graph) + query strip of the same.
    proj_all = proj_ref[...]                                     # (N_pad, HID_pad) bf16
    row0 = pl.multiple_of(pl.program_id(0) * q_block, q_block)
    proj_q = proj_ref[pl.ds(row0, q_block), :]                   # (q_block, HID_pad) bf16

    # sim = proj_q @ proj_all.T as an NT dot_general (no XLU transpose).
    sim = lax.dot_general(proj_q, proj_all, (((1,), (1,)), ((), ())),
                          preferred_element_type=jnp.float32)    # (q_block, N_pad) f32

    # sigmoid(sim / temp) = 0.5 * tanh(0.5 * sim / temp) + 0.5 ; tanh in bf16 on
    # v6e/v7x (bf16 EUP), f32 on v5e.
    x = ((0.5 * inv_temp) * sim).astype(gate_dtype)
    gate = 0.5 * jnp.tanh(x).astype(jnp.float32) + 0.5

    # Apply the adjacency mask with a select (no upcast multiply).
    att = jnp.where(adj_ref[...] != 0, gate, 0.0)                # (q_block, N_pad) f32

    # Row-normalise with q_block approximate reciprocals.
    inv_rowsum = pl.reciprocal(
        jnp.maximum(jnp.sum(att, axis=-1, keepdims=True), 1e-12), approx=True)
    att_n = (att * inv_rowsum).astype(jnp.bfloat16)

    # Propagate and accumulate the head-mean of the propagated part.
    prop = jnp.dot(att_n, feat_ref[...],
                   preferred_element_type=jnp.float32)           # (q_block, D_pad)
    out_ref[...] += ((1.0 - keep_ratio) / n_heads) * prop


def _hop_call(feat_bf, ori, adj_bf, proj_bf, *, keep_ratio, temp, q_block,
              gate_dtype, vmem_limit):
    n_pad, d_pad = feat_bf.shape
    n_heads, _, hid_pad = proj_bf.shape
    n_q = n_pad // q_block

    kernel = functools.partial(
        _hop_kernel,
        keep_ratio=float(keep_ratio),
        inv_temp=float(1.0 / temp),
        n_heads=n_heads,
        q_block=q_block,
        gate_dtype=gate_dtype)

    return pl.pallas_call(
        kernel,
        out_shape=jax.ShapeDtypeStruct((n_pad, d_pad), jnp.float32),
        grid_spec=pltpu.PrefetchScalarGridSpec(
            num_scalar_prefetch=0,
            grid=(n_q, n_heads),
            in_specs=[
                # full features (propagation source), grid-invariant, bf16
                pl.BlockSpec((n_pad, d_pad), lambda q, h: (0, 0)),
                # original-features strip (residual), head-invariant, f32
                pl.BlockSpec((q_block, d_pad), lambda q, h: (q, 0)),
                # adjacency strip (bf16 0/1 mask), head-invariant
                pl.BlockSpec((q_block, n_pad), lambda q, h: (q, 0)),
                # per-head cached normalized projection (full graph), bf16
                pl.BlockSpec((None, n_pad, hid_pad), lambda q, h: (h, 0, 0)),
            ],
            out_specs=pl.BlockSpec((q_block, d_pad), lambda q, h: (q, 0)),
        ),
        compiler_params=pltpu.CompilerParams(
            # q tiles are independent (megacore / v7x second TC); heads is the
            # resident-accumulator (reduction) axis.
            dimension_semantics=("parallel", "arbitrary"),
            vmem_limit_bytes=vmem_limit),
    )(feat_bf, ori, adj_bf, proj_bf)


# ----------------------------------------------------------------------------
# Full module forward: sequential hops (python loop is glue; kernels are hot).
# ----------------------------------------------------------------------------
def multihead_propagation_forward(features, adj_lst, params,
                                  *, keep_ratio, temp, q_block=None):
    """params: list (len == n_hop*2) of dicts with stacked per-head weights."""
    n, d = features.shape
    hid = params[0]["w1"].shape[2]

    d_pad = _round_up(d, 128)
    hid_pad = _round_up(hid, 128)

    vmem_cap = _vmem_capacity_bytes()
    vmem_limit = max(32 * 1024 * 1024, (vmem_cap * 3) // 4)   # 48 MiB on v7x, 96 MiB on v5e/v6e
    if q_block is None:
        q_block = 128 if vmem_cap <= 64 * 1024 * 1024 else 256

    # q_block: multiple of 16 (bf16 sublane packing), and small enough that the
    # node axis splits into >= 2 parallel tiles whenever N > 16.
    half = (((n + 1) // 2) + 15) // 16 * 16
    q_block = max(16, min((q_block // 16) * 16, half))
    n_pad = _round_up(n, q_block)
    gate_dtype = _gate_dtype()

    # Zero-pad node/feature axes once (exact: padded adj rows/cols are zero so
    # padded nodes never contribute, padded feature columns stay zero).
    feat = jnp.pad(features, ((0, n_pad - n), (0, d_pad - d)))
    ori = feat
    adj_bf_lst = [
        jnp.pad(a, ((0, n_pad - n), (0, n_pad - n))).astype(jnp.bfloat16)
        for a in adj_lst
    ]
    padded_params = []
    for p in params:
        padded_params.append({
            "w1": jnp.pad(p["w1"], ((0, 0), (0, d_pad - d), (0, hid_pad - hid))
                          ).astype(jnp.bfloat16),
            "b1": jnp.pad(p["b1"], ((0, 0), (0, 0), (0, hid_pad - hid))),
            "w2": jnp.pad(p["w2"], ((0, 0), (0, hid_pad - hid), (0, hid_pad - hid))
                          ).astype(jnp.bfloat16),
            "b2": jnp.pad(p["b2"], ((0, 0), (0, 0), (0, hid_pad - hid))),
        })

    for p, adj_bf in zip(padded_params, adj_bf_lst):
        feat_bf = feat.astype(jnp.bfloat16)     # cast once per hop in the wrapper
        proj = _proj_call(feat_bf, p["w1"], p["b1"], p["w2"], p["b2"],
                          q_block=q_block, vmem_limit=vmem_limit)
        feat = _hop_call(feat_bf, ori, adj_bf, proj,
                         keep_ratio=keep_ratio, temp=temp, q_block=q_block,
                         gate_dtype=gate_dtype, vmem_limit=vmem_limit)

    return feat[:n, :d]


# ----------------------------------------------------------------------------
# Pure-JAX f32 reference (same math) for a sanity check.
# ----------------------------------------------------------------------------
def _reference_forward(features, adj_lst, params, *, keep_ratio, temp):
    ori = features
    for hop_params, adj in zip(params, adj_lst):
        head_outs = []
        for h in range(hop_params["w1"].shape[0]):
            hid = jnp.maximum(features @ hop_params["w1"][h] + hop_params["b1"][h, 0], 0.0)
            proj = hid @ hop_params["w2"][h] + hop_params["b2"][h, 0]
            proj_n = proj / jnp.maximum(
                jnp.sqrt(jnp.sum(proj * proj, axis=-1, keepdims=True)), 1e-12)
            sim = proj_n @ proj_n.T
            att = jax.nn.sigmoid(sim / temp) * adj
            att = att / jnp.maximum(jnp.sum(att, axis=-1, keepdims=True), 1e-12)
            prop = att @ features
            head_outs.append(keep_ratio * ori + (1.0 - keep_ratio) * prop)
        features = jnp.mean(jnp.stack(head_outs, axis=2), axis=2)
    return features


# ----------------------------------------------------------------------------
# Deterministic parameter / input construction + run.
# ----------------------------------------------------------------------------
def _init_params(key, n_hops, n_heads, input_dim, hid_dim):
    params = []
    for _ in range(n_hops):
        key, k1, k2, k3, k4 = jax.random.split(key, 5)
        params.append({
            "w1": (jax.random.normal(k1, (n_heads, input_dim, hid_dim), jnp.float32)
                   * (1.0 / jnp.sqrt(input_dim))),
            "b1": jax.random.normal(k2, (n_heads, 1, hid_dim), jnp.float32) * 0.01,
            "w2": (jax.random.normal(k3, (n_heads, hid_dim, hid_dim), jnp.float32)
                   * (1.0 / jnp.sqrt(hid_dim))),
            "b2": jax.random.normal(k4, (n_heads, 1, hid_dim), jnp.float32) * 0.01,
        })
    return params


if __name__ == "__main__":
    # Small shapes consistent with the module's forward.
    N_NODES = 32       # number of graph nodes
    INPUT_DIM = 32
    HID_DIM = 32
    N_HOP = 1          # -> n_hop * 2 = 2 propagation hops / adjacency matrices
    N_HEADS = 2
    KEEP_RATIO = 0.5
    TEMP = 0.5

    key = jax.random.PRNGKey(0)
    key, kf, ka0, ka1 = jax.random.split(key, 4)

    features = jax.random.normal(kf, (N_NODES, INPUT_DIM), jnp.float32)

    def make_adj(k):
        a = (jax.random.uniform(k, (N_NODES, N_NODES)) < 0.3).astype(jnp.float32)
        return jnp.maximum(a, jnp.eye(N_NODES, dtype=jnp.float32))  # self-loops

    adj_lst = [make_adj(ka0), make_adj(ka1)]  # length n_hop * 2

    params = _init_params(key, n_hops=N_HOP * 2, n_heads=N_HEADS,
                          input_dim=INPUT_DIM, hid_dim=HID_DIM)

    out = multihead_propagation_forward(
        features, adj_lst, params, keep_ratio=KEEP_RATIO, temp=TEMP)
    out = jax.block_until_ready(out)

    ref = _reference_forward(
        features, adj_lst, params, keep_ratio=KEEP_RATIO, temp=TEMP)
    assert out.shape == (N_NODES, INPUT_DIM)
    # bf16 MXU operands / bf16 tanh gate / approx reciprocal -> compare against
    # the f32 reference with a loosened tolerance.
    assert jnp.allclose(out, ref, rtol=5e-2, atol=6e-2), "mismatch vs reference"

    print("KERNEL_OK")
</pallas_src>

<mosaic_0001>
module attributes {stable_mosaic.version = 11 : i64} {
  func.func @_proj_kernel(%arg0: i32, %arg1: i32, %arg2: memref<16x128xbf16, #tpu.memory_space<vmem>>, %arg3: memref<1x128x128xbf16, #tpu.memory_space<vmem>>, %arg4: memref<1x1x128xf32, #tpu.memory_space<vmem>>, %arg5: memref<1x128x128xbf16, #tpu.memory_space<vmem>>, %arg6: memref<1x1x128xf32, #tpu.memory_space<vmem>>, %arg7: memref<1x16x128xbf16, #tpu.memory_space<vmem>>) attributes {dimension_semantics = [#tpu.dimension_semantics<parallel>, #tpu.dimension_semantics<parallel>], iteration_bounds = array<i64: 2, 2>, scalar_prefetch = 0 : i64, scratch_operands = 0 : i64, tpu.core_type = #tpu.core_type<tc>, window_params = [{transform_indices = @transform_0, window_bounds = array<i64: 16, 128>}, {transform_indices = @transform_1, window_bounds = array<i64: 1, 128, 128>}, {transform_indices = @transform_2, window_bounds = array<i64: 1, 1, 128>}, {transform_indices = @transform_3, window_bounds = array<i64: 1, 128, 128>}, {transform_indices = @transform_4, window_bounds = array<i64: 1, 1, 128>}, {transform_indices = @transform_5, window_bounds = array<i64: 1, 16, 128>}]} {
    %c0 = arith.constant 0 : index
    %c0_0 = arith.constant 0 : index
    %0 = vector.load %arg2[%c0, %c0_0] : memref<16x128xbf16, #tpu.memory_space<vmem>>, vector<16x128xbf16>
    %c0_1 = arith.constant 0 : index
    %c0_2 = arith.constant 0 : index
    %c0_3 = arith.constant 0 : index
    %1 = vector.load %arg3[%c0_1, %c0_2, %c0_3] : memref<1x128x128xbf16, #tpu.memory_space<vmem>>, vector<1x128x128xbf16>
    %2 = vector.shape_cast %1 : vector<1x128x128xbf16> to vector<128x128xbf16>
    %cst = arith.constant dense<0.000000e+00> : vector<16x128xf32>
    %3 = tpu.matmul %0, %2, %cst {dimension_numbers = #tpu.dot_dimension_numbers<[1], [0], [0], [1], [0, 0, 1, 1], [], []>} : vector<16x128xbf16>, vector<128x128xbf16>, vector<16x128xf32> -> vector<16x128xf32>
    %c0_4 = arith.constant 0 : index
    %c0_5 = arith.constant 0 : index
    %c0_6 = arith.constant 0 : index
    %4 = vector.load %arg4[%c0_4, %c0_5, %c0_6] : memref<1x1x128xf32, #tpu.memory_space<vmem>>, vector<1x1x128xf32>
    %5 = vector.shape_cast %4 : vector<1x1x128xf32> to vector<1x128xf32>
    %6 = vector.broadcast %5 : vector<1x128xf32> to vector<16x128xf32>
    %7 = arith.addf %3, %6 : vector<16x128xf32>
    %cst_7 = arith.constant 0.000000e+00 : f32
    %8 = vector.broadcast %cst_7 : f32 to vector<16x128xf32>
    %9 = arith.maximumf %7, %8 : vector<16x128xf32>
    %10 = arith.truncf %9 : vector<16x128xf32> to vector<16x128xbf16>
    %c0_8 = arith.constant 0 : index
    %c0_9 = arith.constant 0 : index
    %c0_10 = arith.constant 0 : index
    %11 = vector.load %arg5[%c0_8, %c0_9, %c0_10] : memref<1x128x128xbf16, #tpu.memory_space<vmem>>, vector<1x128x128xbf16>
    %12 = vector.shape_cast %11 : vector<1x128x128xbf16> to vector<128x128xbf16>
    %cst_11 = arith.constant dense<0.000000e+00> : vector<16x128xf32>
    %13 = tpu.matmul %10, %12, %cst_11 {dimension_numbers = #tpu.dot_dimension_numbers<[1], [0], [0], [1], [0, 0, 1, 1], [], []>} : vector<16x128xbf16>, vector<128x128xbf16>, vector<16x128xf32> -> vector<16x128xf32>
    %c0_12 = arith.constant 0 : index
    %c0_13 = arith.constant 0 : index
    %c0_14 = arith.constant 0 : index
    %14 = vector.load %arg6[%c0_12, %c0_13, %c0_14] : memref<1x1x128xf32, #tpu.memory_space<vmem>>, vector<1x1x128xf32>
    %15 = vector.shape_cast %14 : vector<1x1x128xf32> to vector<1x128xf32>
    %16 = vector.broadcast %15 : vector<1x128xf32> to vector<16x128xf32>
    %17 = arith.addf %13, %16 : vector<16x128xf32>
    %18 = arith.mulf %17, %17 : vector<16x128xf32>
    %cst_15 = arith.constant dense<0.000000e+00> : vector<16xf32>
    %19 = vector.multi_reduction <add>, %18, %cst_15 [1] : vector<16x128xf32> to vector<16xf32>
    %20 = vector.shape_cast %19 : vector<16xf32> to vector<16x1xf32>
    %cst_16 = arith.constant 1.000000e-24 : f32
    %21 = vector.broadcast %cst_16 : f32 to vector<16x1xf32>
    %22 = arith.maximumf %20, %21 : vector<16x1xf32>
    %23 = math.rsqrt %22 : vector<16x1xf32>
    %24 = vector.broadcast %23 : vector<16x1xf32> to vector<16x128xf32>
    %25 = arith.mulf %17, %24 : vector<16x128xf32>
    %26 = arith.truncf %25 : vector<16x128xf32> to vector<16x128xbf16>
    %c0_17 = arith.constant 0 : index
    %c0_18 = arith.constant 0 : index
    %c0_19 = arith.constant 0 : index
    %27 = vector.load %arg7[%c0_17, %c0_18, %c0_19] : memref<1x16x128xbf16, #tpu.memory_space<vmem>>, vector<1x16x128xbf16>
    %28 = vector.shape_cast %27 : vector<1x16x128xbf16> to vector<16x128xbf16>
    %29 = vector.shape_cast %26 : vector<16x128xbf16> to vector<1x16x128xbf16>
    tpu.vector_store %arg7[%c0_17, %c0_18, %c0_19], %29 {strides = array<i32>} : memref<1x16x128xbf16, #tpu.memory_space<vmem>>, vector<1x16x128xbf16>,
    return
  }
  func.func @transform_0(%arg0: i32, %arg1: i32) -> (i32, i32) {
    %c0_i32 = arith.constant 0 : i32
    %c0_i32_0 = arith.constant 0 : i32
    return %arg1, %c0_i32 : i32, i32
  }
  func.func @transform_1(%arg0: i32, %arg1: i32) -> (i32, i32, i32) {
    %c0_i32 = arith.constant 0 : i32
    %c0_i32_0 = arith.constant 0 : i32
    %c0_i32_1 = arith.constant 0 : i32
    return %arg0, %c0_i32, %c0_i32_0 : i32, i32, i32
  }
  func.func @transform_2(%arg0: i32, %arg1: i32) -> (i32, i32, i32) {
    %c0_i32 = arith.constant 0 : i32
    %c0_i32_0 = arith.constant 0 : i32
    %c0_i32_1 = arith.constant 0 : i32
    return %arg0, %c0_i32, %c0_i32_0 : i32, i32, i32
  }
  func.func @transform_3(%arg0: i32, %arg1: i32) -> (i32, i32, i32) {
    %c0_i32 = arith.constant 0 : i32
    %c0_i32_0 = arith.constant 0 : i32
    %c0_i32_1 = arith.constant 0 : i32
    return %arg0, %c0_i32, %c0_i32_0 : i32, i32, i32
  }
  func.func @transform_4(%arg0: i32, %arg1: i32) -> (i32, i32, i32) {
    %c0_i32 = arith.constant 0 : i32
    %c0_i32_0 = arith.constant 0 : i32
    %c0_i32_1 = arith.constant 0 : i32
    return %arg0, %c0_i32, %c0_i32_0 : i32, i32, i32
  }
  func.func @transform_5(%arg0: i32, %arg1: i32) -> (i32, i32, i32) {
    %c0_i32 = arith.constant 0 : i32
    %c0_i32_0 = arith.constant 0 : i32
    return %arg0, %arg1, %c0_i32 : i32, i32, i32
  }
}

</mosaic_0001>

<llo_original>
// kernel: tpu_custom_call.1
$region0: #{tpu_custom_call.1}
  #allocation0 [shape = 'u32[]', space=smem, size = 0x4, offset = 0x4, fixed_abs, tag = 'smem constant byte address 0x4 - core index']
  #allocation1 [shape = 'u32[144,128]{1,0:T(1,128)}', space=vmem, size = 0x12000, scoped, tag = 'internal scratch']
  %s0 = inlined_call_operand.hbm [shape: bf16[32,128], index: 0, kind: input, shape index: {}]
  %s1 = inlined_call_operand.hbm [shape: bf16[2,128,128], index: 1, kind: input, shape index: {}]
  %s2 = inlined_call_operand.hbm [shape: f32[2,1,128], index: 2, kind: input, shape index: {}]
  %s3 = inlined_call_operand.hbm [shape: bf16[2,128,128], index: 3, kind: input, shape index: {}]
  %s4 = inlined_call_operand.hbm [shape: f32[2,1,128], index: 4, kind: input, shape index: {}]
  %s5 = inlined_call_operand.hbm [shape: bf16[2,32,128], index: 5, kind: output, shape index: {}]
  %s6 = sld [smem:[#allocation0]]
  $region73: #{tpu_custom_call.1} parent=0
    _
  %s8 = ssub.s32 1, %s6
  %s9 = scalar_select 0, %s8, %s6
  $region1: #{tpu_custom_call.1} parent=0
    #allocation2 [shape = 'u8[8192]{0}', space=vmem, size = 0x2000, scoped, tag = 'input window, operand 0']
    #allocation3 [shape = 's32[2]{0}', space=sflag, size = 0x8, scoped, tag = 'scoped memory for tpu_custom_call.1']
    #allocation4 [shape = 's32[2]{0}', space=sflag, size = 0x8, scoped, tag = 'scoped memory for tpu_custom_call.1']
    #allocation5 [shape = 'u8[65536]{0}', space=vmem, size = 0x10000, scoped, tag = 'input window, operand 1']
    #allocation6 [shape = 's32[2]{0}', space=sflag, size = 0x8, scoped, tag = 'scoped memory for tpu_custom_call.1']
    #allocation7 [shape = 'u8[1024]{0}', space=vmem, size = 0x400, scoped, tag = 'input window, operand 2']
    #allocation8 [shape = 'u8[65536]{0}', space=vmem, size = 0x10000, scoped, tag = 'input window, operand 3']
    #allocation9 [shape = 's32[2]{0}', space=sflag, size = 0x8, scoped, tag = 'scoped memory for tpu_custom_call.1']
    #allocation10 [shape = 'u8[1024]{0}', space=vmem, size = 0x400, scoped, tag = 'input window, operand 4']
    #allocation11 [shape = 'u8[8192]{0}', space=vmem, size = 0x2000, scoped, tag = 'output window, operand 0']
    %10 = vsyncpa [#allocation3], 0
    %s11 = scalar_lea.sflag [#allocation3], 1
    %12 = vsyncpa %s11, 0
    %13 = vsyncpa [#allocation6], 0
    %s14 = scalar_lea.sflag [#allocation6], 1
    %15 = vsyncpa %s14, 0
    %16 = vsyncpa [#allocation9], 0
    %s17 = scalar_lea.sflag [#allocation9], 1
    %18 = vsyncpa %s17, 0
    %19 = vsyncpa [#allocation4], 0
    %s20 = scalar_lea.sflag [#allocation4], 1
    %21 = vsyncpa %s20, 0
    loop: start=0, step=1, limit=6
    $region2: #{tpu_custom_call.1} parent=1 // loop_pre_header
      _
    $region3: #{tpu_custom_call.1} parent=1 // loop_header
      %s23 = sphi 0, %s27
      %p24 = scmp.ge.s32.totalorder %s23, 6
      %s30 = sphi 0, %s42
      %s31 = sphi 0, %s38
      %s32 = sphi 0, %s30
      %s33 = sphi 0, %s31
      %s34 = sphi 0, %s32
      %s35 = sphi 0, %s33
      %s45 = sphi 0, %s47
      %s48 = sphi 0, %s45
      %s49 = sphi 0, %s48
      %s65 = sphi 0, %s49
      %s71 = sphi 0, %s73
      %s74 = sphi 0, %s71
      %s75 = sphi 0, %s74
      %s91 = sphi 0, %s75
      %s97 = sphi 0, %s99
      %s100 = sphi 0, %s97
      %s101 = sphi 0, %s100
      %s117 = sphi 0, %s101
      %s123 = sphi 0, %s125
      %s126 = sphi 0, %s123
      %s127 = sphi 0, %s126
      %s143 = sphi 0, %s127
      %s149 = sphi 0, %s151
      %s152 = sphi 0, %s149
      %s153 = sphi 0, %s152
      %s169 = sphi 0, %s153
      %s177 = sphi 0, %s179
      %s180 = sphi 0, %s177
      %s181 = sphi 0, %s180
      %s197 = sphi 0, %s181
    $region4: #{tpu_custom_call.1} parent=1 // loop_header_branch
      %26 = sbr.rel (%p24) target = $region8
    $region5: #{tpu_custom_call.1} parent=1 // loop_body
      %s28 = ssub.s32 %s23, 1
      %s29 = ssub.s32 %s23, 2
      %s36 = sadd.s32 1, %s31
      %p37 = scmp.ge.s32.totalorder %s36, 2
      %s38 = scalar_select %p37, 0, %s36
      %s39 = sadd.s32 1, %s30
      %s40 = scalar_select %p37, %s39, %s30
      %p41 = scmp.ge.s32.totalorder %s40, 2
      %s42 = scalar_select %p41, 0, %s40
      %s43 = ssub.s32 %s31, %s38
      %p44 = scmp.eq.s32.totalorder %s43, 0
      %s46 = sadd.s32 %s45, 1
      %s47 = scalar_select %p44, %s45, %s46
      %p50 = pneg %p44
      %p51 = scmp.eq.s32.totalorder %s23, 3
      %p52 = por %p50, %p51
      %p53 = scmp.ne.s32.totalorder %s45, %s48
      %p54 = scmp.eq.s32.totalorder %s23, 0
      %p55 = por %p53, %p54
      %p56 = scmp.ne.s32.totalorder %s45, %s48
      %p57 = scmp.eq.s32.totalorder %s28, 3
      %p58 = por %p56, %p57
      %p59 = scmp.ne.s32.totalorder %s48, %s49
      %p60 = scmp.eq.s32.totalorder %s28, 0
      %p61 = por %p59, %p60
      %p62 = scmp.ne.s32.totalorder %s48, %s49
      %p63 = scmp.eq.s32.totalorder %s29, 3
      %p64 = por %p62, %p63
      %p66 = scmp.ne.s32.totalorder %s49, %s65
      %p67 = scmp.eq.s32.totalorder %s29, 0
      %p68 = por %p66, %p67
      %s69 = ssub.s32 %s30, %s42
      %p70 = scmp.eq.s32.totalorder %s69, 0
      %s72 = sadd.s32 %s71, 1
      %s73 = scalar_select %p70, %s71, %s72
      %p76 = pneg %p70
      %p77 = scmp.eq.s32.totalorder %s23, 3
      %p78 = por %p76, %p77
      %p79 = scmp.ne.s32.totalorder %s71, %s74
      %p80 = scmp.eq.s32.totalorder %s23, 0
      %p81 = por %p79, %p80
      %p82 = scmp.ne.s32.totalorder %s71, %s74
      %p83 = scmp.eq.s32.totalorder %s28, 3
      %p84 = por %p82, %p83
      %p85 = scmp.ne.s32.totalorder %s74, %s75
      %p86 = scmp.eq.s32.totalorder %s28, 0
      %p87 = por %p85, %p86
      %p88 = scmp.ne.s32.totalorder %s74, %s75
      %p89 = scmp.eq.s32.totalorder %s29, 3
      %p90 = por %p88, %p89
      %p92 = scmp.ne.s32.totalorder %s75, %s91
      %p93 = scmp.eq.s32.totalorder %s29, 0
      %p94 = por %p92, %p93
      %s95 = ssub.s32 %s30, %s42
      %p96 = scmp.eq.s32.totalorder %s95, 0
      %s98 = sadd.s32 %s97, 1
      %s99 = scalar_select %p96, %s97, %s98
      %p102 = pneg %p96
      %p103 = scmp.eq.s32.totalorder %s23, 3
      %p104 = por %p102, %p103
      %p105 = scmp.ne.s32.totalorder %s97, %s100
      %p106 = scmp.eq.s32.totalorder %s23, 0
      %p107 = por %p105, %p106
      %p108 = scmp.ne.s32.totalorder %s97, %s100
      %p109 = scmp.eq.s32.totalorder %s28, 3
      %p110 = por %p108, %p109
      %p111 = scmp.ne.s32.totalorder %s100, %s101
      %p112 = scmp.eq.s32.totalorder %s28, 0
      %p113 = por %p111, %p112
      %p114 = scmp.ne.s32.totalorder %s100, %s101
      %p115 = scmp.eq.s32.totalorder %s29, 3
      %p116 = por %p114, %p115
      %p118 = scmp.ne.s32.totalorder %s101, %s117
      %p119 = scmp.eq.s32.totalorder %s29, 0
      %p120 = por %p118, %p119
      %s121 = ssub.s32 %s30, %s42
      %p122 = scmp.eq.s32.totalorder %s121, 0
      %s124 = sadd.s32 %s123, 1
      %s125 = scalar_select %p122, %s123, %s124
      %p128 = pneg %p122
      %p129 = scmp.eq.s32.totalorder %s23, 3
      %p130 = por %p128, %p129
      %p131 = scmp.ne.s32.totalorder %s123, %s126
      %p132 = scmp.eq.s32.totalorder %s23, 0
      %p133 = por %p131, %p132
      %p134 = scmp.ne.s32.totalorder %s123, %s126
      %p135 = scmp.eq.s32.totalorder %s28, 3
      %p136 = por %p134, %p135
      %p137 = scmp.ne.s32.totalorder %s126, %s127
      %p138 = scmp.eq.s32.totalorder %s28, 0
      %p139 = por %p137, %p138
      %p140 = scmp.ne.s32.totalorder %s126, %s127
      %p141 = scmp.eq.s32.totalorder %s29, 3
      %p142 = por %p140, %p141
      %p144 = scmp.ne.s32.totalorder %s127, %s143
      %p145 = scmp.eq.s32.totalorder %s29, 0
      %p146 = por %p144, %p145
      %s147 = ssub.s32 %s30, %s42
      %p148 = scmp.eq.s32.totalorder %s147, 0
      %s150 = sadd.s32 %s149, 1
      %s151 = scalar_select %p148, %s149, %s150
      %p154 = pneg %p148
      %p155 = scmp.eq.s32.totalorder %s23, 3
      %p156 = por %p154, %p155
      %p157 = scmp.ne.s32.totalorder %s149, %s152
      %p158 = scmp.eq.s32.totalorder %s23, 0
      %p159 = por %p157, %p158
      %p160 = scmp.ne.s32.totalorder %s149, %s152
      %p161 = scmp.eq.s32.totalorder %s28, 3
      %p162 = por %p160, %p161
      %p163 = scmp.ne.s32.totalorder %s152, %s153
      %p164 = scmp.eq.s32.totalorder %s28, 0
      %p165 = por %p163, %p164
      %p166 = scmp.ne.s32.totalorder %s152, %s153
      %p167 = scmp.eq.s32.totalorder %s29, 3
      %p168 = por %p166, %p167
      %p170 = scmp.ne.s32.totalorder %s153, %s169
      %p171 = scmp.eq.s32.totalorder %s29, 0
      %p172 = por %p170, %p171
      %s173 = ssub.s32 %s30, %s42
      %s174 = ssub.s32 %s31, %s38
      %s175 = sor.u32 %s173, %s174
      %p176 = scmp.eq.s32.totalorder %s175, 0
      %s178 = sadd.s32 %s177, 1
      %s179 = scalar_select %p176, %s177, %s178
      %p182 = pneg %p176
      %p183 = scmp.eq.s32.totalorder %s23, 3
      %p184 = por %p182, %p183
      %p185 = scmp.ne.s32.totalorder %s177, %s180
      %p186 = scmp.eq.s32.totalorder %s23, 0
      %p187 = por %p185, %p186
      %p188 = scmp.ne.s32.totalorder %s177, %s180
      %p189 = scmp.eq.s32.totalorder %s28, 3
      %p190 = por %p188, %p189
      %p191 = scmp.ne.s32.totalorder %s180, %s181
      %p192 = scmp.eq.s32.totalorder %s28, 0
      %p193 = por %p191, %p192
      %p194 = scmp.ne.s32.totalorder %s180, %s181
      %p195 = scmp.eq.s32.totalorder %s29, 3
      %p196 = por %p194, %p195
      %p198 = scmp.ne.s32.totalorder %s181, %s197
      %p199 = scmp.eq.s32.totalorder %s29, 0
      %p200 = por %p198, %p199
      %p201 = scmp.le.s32.totalorder 1, %s23
      %p202 = scmp.lt.s32.totalorder %s23, 5
      %p203 = pnand %p201, %p202
      %p204 = pneg %p203
      // Predicated region
      $region9: #{tpu_custom_call.1} parent=5 // pred_check
        _
      $region10: #{tpu_custom_call.1} parent=5 // pred_check_branch
        %206 = sbr.rel (%p203) target = $region12
      $region11: #{tpu_custom_call.1} parent=5 // pred_region
        %s207 = ssub.s32 %s23, 1
      $region12: #{tpu_custom_call.1} parent=5 // pred_fallthru
        _
      %p208 = scmp.lt.s32.totalorder %s23, 4
      // Predicated region
      $region13: #{tpu_custom_call.1} parent=5 // pred_check
        %p209 = pneg %p208
      $region14: #{tpu_custom_call.1} parent=5 // pred_check_branch
        %211 = sbr.rel (%p209) target = $region16
      $region15: #{tpu_custom_call.1} parent=5 // pred_region
        // Predicated region
        $region17: #{tpu_custom_call.1} parent=15 // pred_check
          %p212 = pneg %p55
        $region18: #{tpu_custom_call.1} parent=15 // pred_check_branch
          %214 = sbr.rel (%p212) target = $region20
        $region19: #{tpu_custom_call.1} parent=15 // pred_region
          %s215 = sand.u32 %s45, 1
          %s216 = scalar_lea.sflag [#allocation3], %s215
          %s217 = sand.u32 %s45, 1
          %s218 = smul.addr %s217, 8
          %s219 = scalar_lea.vmem [#allocation2], %s218
          %s220 = smul.u32 2, %s31
          %s222 = ssub.s32 128, 128
          %223 = vsyncadd %s216, %s222
          %s224 = smul.addr %s220, 64
          %s225 = scalar_lea.hbm %s0, %s224
          %s226 = sshll.u32 %s219, 4
          %s227 = int_to_ptr.vmem [resolvable:$true] %s226
          %232 = dma.hbm_to_vmem [thread:$0]  %s225, 128, %s227, %s216, 64, 64, 4
        $region20: #{tpu_custom_call.1} parent=15 // pred_fallthru
          _
        // Predicated region
        $region21: #{tpu_custom_call.1} parent=15 // pred_check
          %p233 = pneg %p81
        $region22: #{tpu_custom_call.1} parent=15 // pred_check_branch
          %235 = sbr.rel (%p233) target = $region24
        $region23: #{tpu_custom_call.1} parent=15 // pred_region
          %s236 = sand.u32 %s23, 1
          %s237 = scalar_lea.sflag [#allocation6], %s236
          %s238 = sand.u32 %s71, 1
          %s239 = smul.addr %s238, 64
          %s240 = scalar_lea.vmem [#allocation5], %s239
          %s242 = ssub.s32 1024, 1024
          %243 = vsyncadd %s237, %s242
          %s244 = smul.addr %s30, 16
          %s245 = smul.addr %s244, 64
          %s246 = scalar_lea.hbm %s1, %s245
          %s247 = sshll.u32 %s240, 4
          %s248 = int_to_ptr.vmem [resolvable:$true] %s247
          %253 = dma.hbm_to_vmem [thread:$0]  %s246, 1024, %s248, %s237, 64, 64, 4
        $region24: #{tpu_custom_call.1} parent=15 // pred_fallthru
          _
        // Predicated region
        $region25: #{tpu_custom_call.1} parent=15 // pred_check
          %p254 = pneg %p107
        $region26: #{tpu_custom_call.1} parent=15 // pred_check_branch
          %256 = sbr.rel (%p254) target = $region28
        $region27: #{tpu_custom_call.1} parent=15 // pred_region
          %s257 = sand.u32 %s23, 1
          %s258 = scalar_lea.sflag [#allocation6], %s257
          %s259 = sand.u32 %s97, 1
          %s260 = scalar_lea.vmem [#allocation7], %s259
          %s262 = ssub.s32 16, 16
          %263 = vsyncadd %s258, %s262
          %s264 = smul.addr %s30, 16
          %s265 = scalar_lea.hbm %s2, %s264
          %s267 = sshll.u32 %s260, 4
          %s268 = int_to_ptr.vmem [resolvable:$true] %s267
          %270 = dma.hbm_to_vmem [thread:$0]  %s265, 16, %s268, %s258
        $region28: #{tpu_custom_call.1} parent=15 // pred_fallthru
          _
        // Predicated region
        $region29: #{tpu_custom_call.1} parent=15 // pred_check
          %p271 = pneg %p133
        $region30: #{tpu_custom_call.1} parent=15 // pred_check_branch
          %273 = sbr.rel (%p271) target = $region32
        $region31: #{tpu_custom_call.1} parent=15 // pred_region
          %s274 = sand.u32 %s23, 1
          %s275 = scalar_lea.sflag [#allocation9], %s274
          %s276 = sand.u32 %s123, 1
          %s277 = smul.addr %s276, 64
          %s278 = scalar_lea.vmem [#allocation8], %s277
          %s280 = ssub.s32 1024, 1024
          %281 = vsyncadd %s275, %s280
          %s282 = smul.addr %s30, 16
          %s283 = smul.addr %s282, 64
          %s284 = scalar_lea.hbm %s3, %s283
          %s285 = sshll.u32 %s278, 4
          %s286 = int_to_ptr.vmem [resolvable:$true] %s285
          %291 = dma.hbm_to_vmem [thread:$0]  %s284, 1024, %s286, %s275, 64, 64, 4
        $region32: #{tpu_custom_call.1} parent=15 // pred_fallthru
          _
        // Predicated region
        $region33: #{tpu_custom_call.1} parent=15 // pred_check
          %p292 = pneg %p159
        $region34: #{tpu_custom_call.1} parent=15 // pred_check_branch
          %294 = sbr.rel (%p292) target = $region36
        $region35: #{tpu_custom_call.1} parent=15 // pred_region
          %s295 = sand.u32 %s23, 1
          %s296 = scalar_lea.sflag [#allocation9], %s295
          %s297 = sand.u32 %s149, 1
          %s298 = scalar_lea.vmem [#allocation10], %s297
          %s300 = ssub.s32 16, 16
          %301 = vsyncadd %s296, %s300
          %s302 = smul.addr %s30, 16
          %s303 = scalar_lea.hbm %s4, %s302
          %s305 = sshll.u32 %s298, 4
          %s306 = int_to_ptr.vmem [resolvable:$true] %s305
          %308 = dma.hbm_to_vmem [thread:$0]  %s303, 16, %s306, %s296
        $region36: #{tpu_custom_call.1} parent=15 // pred_fallthru
          _
      $region16: #{tpu_custom_call.1} parent=5 // pred_fallthru
        _
      %p309 = scmp.le.s32.totalorder 1, %s23
      %p310 = scmp.lt.s32.totalorder %s23, 5
      %p311 = pnand %p309, %p310
      %p312 = pneg %p311
      // Predicated region
      $region37: #{tpu_custom_call.1} parent=5 // pred_check
        _
      $region38: #{tpu_custom_call.1} parent=5 // pred_check_branch
        %314 = sbr.rel (%p311) target = $region40
      $region39: #{tpu_custom_call.1} parent=5 // pred_region
        %s315 = ssub.s32 %s23, 1
        %s316 = sand.u32 %s48, 1
        %s317 = scalar_lea.sflag [#allocation3], %s316
        %s318 = sand.u32 %s48, 1
        %s319 = smul.addr %s318, 8
        %s320 = scalar_lea.vmem [#allocation2], %s319
        // Predicated region
        $region41: #{tpu_custom_call.1} parent=39 // pred_check
          %p321 = pneg %p61
        $region42: #{tpu_custom_call.1} parent=39 // pred_check_branch
          %323 = sbr.rel (%p321) target = $region44
        $region43: #{tpu_custom_call.1} parent=39 // pred_region
          %324 = dma.done %s317, 128
        $region44: #{tpu_custom_call.1} parent=39 // pred_fallthru
          _
        %s325 = sand.u32 %s28, 1
        %s326 = scalar_lea.sflag [#allocation6], %s325
        %s327 = sand.u32 %s74, 1
        %s328 = smul.addr %s327, 64
        %s329 = scalar_lea.vmem [#allocation5], %s328
        // Predicated region
        $region45: #{tpu_custom_call.1} parent=39 // pred_check
          %p330 = pneg %p87
        $region46: #{tpu_custom_call.1} parent=39 // pred_check_branch
          %332 = sbr.rel (%p330) target = $region48
        $region47: #{tpu_custom_call.1} parent=39 // pred_region
          %333 = dma.done %s326, 1024
        $region48: #{tpu_custom_call.1} parent=39 // pred_fallthru
          _
        %s334 = sand.u32 %s28, 1
        %s335 = scalar_lea.sflag [#allocation6], %s334
        %s336 = sand.u32 %s100, 1
        %s337 = scalar_lea.vmem [#allocation7], %s336
        // Predicated region
        $region49: #{tpu_custom_call.1} parent=39 // pred_check
          %p338 = pneg %p113
        $region50: #{tpu_custom_call.1} parent=39 // pred_check_branch
          %340 = sbr.rel (%p338) target = $region52
        $region51: #{tpu_custom_call.1} parent=39 // pred_region
          %341 = dma.done %s335, 16
        $region52: #{tpu_custom_call.1} parent=39 // pred_fallthru
          _
        %s342 = sand.u32 %s28, 1
        %s343 = scalar_lea.sflag [#allocation9], %s342
        %s344 = sand.u32 %s126, 1
        %s345 = smul.addr %s344, 64
        %s346 = scalar_lea.vmem [#allocation8], %s345
        // Predicated region
        $region53: #{tpu_custom_call.1} parent=39 // pred_check
          %p347 = pneg %p139
        $region54: #{tpu_custom_call.1} parent=39 // pred_check_branch
          %349 = sbr.rel (%p347) target = $region56
        $region55: #{tpu_custom_call.1} parent=39 // pred_region
          %350 = dma.done %s343, 1024
        $region56: #{tpu_custom_call.1} parent=39 // pred_fallthru
          _
        %s351 = sand.u32 %s28, 1
        %s352 = scalar_lea.sflag [#allocation9], %s351
        %s353 = sand.u32 %s152, 1
        %s354 = scalar_lea.vmem [#allocation10], %s353
        // Predicated region
        $region57: #{tpu_custom_call.1} parent=39 // pred_check
          %p355 = pneg %p165
        $region58: #{tpu_custom_call.1} parent=39 // pred_check_branch
          %357 = sbr.rel (%p355) target = $region60
        $region59: #{tpu_custom_call.1} parent=39 // pred_region
          %358 = dma.done %s352, 16
        $region60: #{tpu_custom_call.1} parent=39 // pred_fallthru
          _
        %s359 = sand.u32 %s48, 1
        %s360 = scalar_lea.sflag [#allocation3], %s359
        %s361 = sand.u32 %s48, 1
        %s362 = smul.addr %s361, 8
        %s363 = scalar_lea.vmem [#allocation2], %s362
        %p364 = pneg %p61
        %p365 = pneg %p58
        %s366 = sand.u32 %s28, 1
        %s367 = scalar_lea.sflag [#allocation6], %s366
        %s368 = sand.u32 %s74, 1
        %s369 = smul.addr %s368, 64
        %s370 = scalar_lea.vmem [#allocation5], %s369
        %p371 = pneg %p87
        %p372 = pneg %p84
        %s373 = sand.u32 %s28, 1
        %s374 = scalar_lea.sflag [#allocation6], %s373
        %s375 = sand.u32 %s100, 1
        %s376 = scalar_lea.vmem [#allocation7], %s375
        %p377 = pneg %p113
        %p378 = pneg %p110
        %s379 = sand.u32 %s28, 1
        %s380 = scalar_lea.sflag [#allocation9], %s379
        %s381 = sand.u32 %s126, 1
        %s382 = smul.addr %s381, 64
        %s383 = scalar_lea.vmem [#allocation8], %s382
        %p384 = pneg %p139
        %p385 = pneg %p136
        %s386 = sand.u32 %s28, 1
        %s387 = scalar_lea.sflag [#allocation9], %s386
        %s388 = sand.u32 %s152, 1
        %s389 = scalar_lea.vmem [#allocation10], %s388
        %p390 = pneg %p165
        %p391 = pneg %p162
        %p392 = pneg %p193
        %p393 = pneg %p190
        %s394 = sand.u32 %s180, 1
        %s395 = scalar_lea.sflag [#allocation4], %s394
        %s396 = sand.u32 %s180, 1
        %s397 = smul.addr %s396, 8
        %s398 = scalar_lea.vmem [#allocation11], %s397
        %s399 = smul.u32 2, %s33
        %s400 = smul.u32 2, %s33
        %v402 = vld [vmem:[%s320] sm:$0xf]
        %v403 = vld [vmem:[%s320 + $0x4] sm:$0xf]
        %v404 = vld [vmem:[%s329] sm:$0xf]
        %v405 = vld [vmem:[%s329 + $0x4] sm:$0xf]
        %v406 = vld [vmem:[%s329 + $0x8] sm:$0xf]
        %v407 = vld [vmem:[%s329 + $0xc] sm:$0xf]
        %v408 = vld [vmem:[%s329 + $0x10] sm:$0xf]
        %v409 = vld [vmem:[%s329 + $0x14] sm:$0xf]
        %v410 = vld [vmem:[%s329 + $0x18] sm:$0xf]
        %v411 = vld [vmem:[%s329 + $0x1c] sm:$0xf]
        %v412 = vld [vmem:[%s329 + $0x20] sm:$0xf]
        %v413 = vld [vmem:[%s329 + $0x24] sm:$0xf]
        %v414 = vld [vmem:[%s329 + $0x28] sm:$0xf]
        %v415 = vld [vmem:[%s329 + $0x2c] sm:$0xf]
        %v416 = vld [vmem:[%s329 + $0x30] sm:$0xf]
        %v417 = vld [vmem:[%s329 + $0x34] sm:$0xf]
        %v418 = vld [vmem:[%s329 + $0x38] sm:$0xf]
        %v419 = vld [vmem:[%s329 + $0x3c] sm:$0xf]
        %v420 = vld [vmem:[%s337] sm:$0x1]
        %v422 = vlaneseq
        %v423 = vshrl.u32 %v422, 7
        %v424 = vsub.s32 0, %v423
        %v425 = vrot.slane %v420, %v424
        %v429 = vunpack.c.l.b16 %v402
        %v430 = vunpack.c.l.b16 %v403
        %v431 = vpack.c.b16 %v430, %v429
        %v449 = vunpack.c.l.b16 %v404
        %v450 = vunpack.c.l.b16 %v405
        %v451 = vunpack.c.l.b16 %v406
        %v452 = vunpack.c.l.b16 %v407
        %v453 = vunpack.c.l.b16 %v408
        %v454 = vunpack.c.l.b16 %v409
        %v455 = vunpack.c.l.b16 %v410
        %v456 = vunpack.c.l.b16 %v411
        %v457 = vunpack.c.l.b16 %v412
        %v458 = vunpack.c.l.b16 %v413
        %v459 = vunpack.c.l.b16 %v414
        %v460 = vunpack.c.l.b16 %v415
        %v461 = vunpack.c.l.b16 %v416
        %v462 = vunpack.c.l.b16 %v417
        %v463 = vunpack.c.l.b16 %v418
        %v464 = vunpack.c.l.b16 %v419
        %v465 = vpack.c.b16 %v450, %v449
        %v466 = vpack.c.b16 %v452, %v451
        %v467 = vpack.c.b16 %v454, %v453
        %v468 = vpack.c.b16 %v456, %v455
        %v469 = vpack.c.b16 %v458, %v457
        %v470 = vpack.c.b16 %v460, %v459
        %v471 = vpack.c.b16 %v462, %v461
        %v472 = vpack.c.b16 %v464, %v463
        %481 = vmatprep.subr.bf16.mxu0 0
        %482 = vmatpush1.bf16.msra.mxu0 %v465
        %483 = vmatprep.subr.bf16.mxu0 0
        %484 = vmatpush1.bf16.msra.mxu0 %v466
        %485 = vmatprep.subr.bf16.mxu0 0
        %486 = vmatpush1.bf16.msra.mxu0 %v467
        %487 = vmatprep.subr.bf16.mxu0 0
        %488 = vmatpush1.bf16.msra.mxu0 %v468
        %489 = vmatprep.subr.bf16.mxu0 0
        %490 = vmatpush1.bf16.msra.mxu0 %v469
        %491 = vmatprep.subr.bf16.mxu0 0
        %492 = vmatpush1.bf16.msra.mxu0 %v470
        %493 = vmatprep.subr.bf16.mxu0 0
        %494 = vmatpush1.bf16.msra.mxu0 %v471
        %495 = vmatprep.subr.bf16.mxu0 0
        %496 = vmatpush1.bf16.msra.mxu0 %v472
        %497 = vmatprep.subr.bf16.mxu0 0
        %498 = vmatpush1.bf16.msra.mxu0 0
        %499 = vmatprep.subr.bf16.mxu0 0
        %500 = vmatpush1.bf16.msra.mxu0 0
        %501 = vmatprep.subr.bf16.mxu0 0
        %502 = vmatpush1.bf16.msra.mxu0 0
        %503 = vmatprep.subr.bf16.mxu0 0
        %504 = vmatpush1.bf16.msra.mxu0 0
        %505 = vmatprep.subr.bf16.mxu0 0
        %506 = vmatpush1.bf16.msra.mxu0 0
        %507 = vmatprep.subr.bf16.mxu0 0
        %508 = vmatpush1.bf16.msra.mxu0 0
        %509 = vmatprep.subr.bf16.mxu0 0
        %510 = vmatpush1.bf16.msra.mxu0 0
        %511 = vmatprep.subr.bf16.mxu0 0
        %512 = vmatpush1.bf16.msra.mxu0 0
        %513 = vmatprep.mubr.bf16.mxu0 0
        %514 = vmatmul.mubr.bf16.gmra.mrb[0].mxu0 %v431
        %v515 = vpop.f32.mrb[0].mxu0
        %v516 = vadd.f32 %v425, %v515
        %v517 = vpop.f32.mrb[0].mxu0
        %v518 = vpop.f32.mrb[0].mxu0
        %v519 = vadd.f32 %v425, %v518
        %v520 = vpop.f32.mrb[0].mxu0
        %521 = vdwg.mxu0
        %v522 = vmax.f32 %v516, 0.0
        %v523 = vmax.f32 %v519, 0.0
        %v524 = vpack.c.bf16 %v523, %v522
        %v525 = vld [vmem:[%s346] sm:$0xf]
        %v526 = vld [vmem:[%s346 + $0x4] sm:$0xf]
        %v527 = vld [vmem:[%s346 + $0x8] sm:$0xf]
        %v528 = vld [vmem:[%s346 + $0xc] sm:$0xf]
        %v529 = vld [vmem:[%s346 + $0x10] sm:$0xf]
        %v530 = vld [vmem:[%s346 + $0x14] sm:$0xf]
        %v531 = vld [vmem:[%s346 + $0x18] sm:$0xf]
        %v532 = vld [vmem:[%s346 + $0x1c] sm:$0xf]
        %v533 = vld [vmem:[%s346 + $0x20] sm:$0xf]
        %v534 = vld [vmem:[%s346 + $0x24] sm:$0xf]
        %v535 = vld [vmem:[%s346 + $0x28] sm:$0xf]
        %v536 = vld [vmem:[%s346 + $0x2c] sm:$0xf]
        %v537 = vld [vmem:[%s346 + $0x30] sm:$0xf]
        %v538 = vld [vmem:[%s346 + $0x34] sm:$0xf]
        %v539 = vld [vmem:[%s346 + $0x38] sm:$0xf]
        %v540 = vld [vmem:[%s346 + $0x3c] sm:$0xf]
        %v541 = vld [vmem:[%s354] sm:$0x1]
        %v543 = vlaneseq
        %v544 = vshrl.u32 %v543, 7
        %v545 = vsub.s32 0, %v544
        %v546 = vrot.slane %v541, %v545
        %v564 = vunpack.c.l.b16 %v525
        %v565 = vunpack.c.l.b16 %v526
        %v566 = vunpack.c.l.b16 %v527
        %v567 = vunpack.c.l.b16 %v528
        %v568 = vunpack.c.l.b16 %v529
        %v569 = vunpack.c.l.b16 %v530
        %v570 = vunpack.c.l.b16 %v531
        %v571 = vunpack.c.l.b16 %v532
        %v572 = vunpack.c.l.b16 %v533
        %v573 = vunpack.c.l.b16 %v534
        %v574 = vunpack.c.l.b16 %v535
        %v575 = vunpack.c.l.b16 %v536
        %v576 = vunpack.c.l.b16 %v537
        %v577 = vunpack.c.l.b16 %v538
        %v578 = vunpack.c.l.b16 %v539
        %v579 = vunpack.c.l.b16 %v540
        %v580 = vpack.c.b16 %v565, %v564
        %v581 = vpack.c.b16 %v567, %v566
        %v582 = vpack.c.b16 %v569, %v568
        %v583 = vpack.c.b16 %v571, %v570
        %v584 = vpack.c.b16 %v573, %v572
        %v585 = vpack.c.b16 %v575, %v574
        %v586 = vpack.c.b16 %v577, %v576
        %v587 = vpack.c.b16 %v579, %v578
        %596 = vmatprep.subr.bf16.mxu0 0
        %597 = vmatpush1.bf16.msra.mxu0 %v580
        %598 = vmatprep.subr.bf16.mxu0 0
        %599 = vmatpush1.bf16.msra.mxu0 %v581
        %600 = vmatprep.subr.bf16.mxu0 0
        %601 = vmatpush1.bf16.msra.mxu0 %v582
        %602 = vmatprep.subr.bf16.mxu0 0
        %603 = vmatpush1.bf16.msra.mxu0 %v583
        %604 = vmatprep.subr.bf16.mxu0 0
        %605 = vmatpush1.bf16.msra.mxu0 %v584
        %606 = vmatprep.subr.bf16.mxu0 0
        %607 = vmatpush1.bf16.msra.mxu0 %v585
        %608 = vmatprep.subr.bf16.mxu0 0
        %609 = vmatpush1.bf16.msra.mxu0 %v586
        %610 = vmatprep.subr.bf16.mxu0 0
        %611 = vmatpush1.bf16.msra.mxu0 %v587
        %612 = vmatprep.subr.bf16.mxu0 0
        %613 = vmatpush1.bf16.msra.mxu0 0
        %614 = vmatprep.subr.bf16.mxu0 0
        %615 = vmatpush1.bf16.msra.mxu0 0
        %616 = vmatprep.subr.bf16.mxu0 0
        %617 = vmatpush1.bf16.msra.mxu0 0
        %618 = vmatprep.subr.bf16.mxu0 0
        %619 = vmatpush1.bf16.msra.mxu0 0
        %620 = vmatprep.subr.bf16.mxu0 0
        %621 = vmatpush1.bf16.msra.mxu0 0
        %622 = vmatprep.subr.bf16.mxu0 0
        %623 = vmatpush1.bf16.msra.mxu0 0
        %624 = vmatprep.subr.bf16.mxu0 0
        %625 = vmatpush1.bf16.msra.mxu0 0
        %626 = vmatprep.subr.bf16.mxu0 0
        %627 = vmatpush1.bf16.msra.mxu0 0
        %628 = vmatprep.mubr.bf16.mxu0 0
        %629 = vmatmul.mubr.bf16.gmra.mrb[0].mxu0 %v524
        %v630 = vpop.f32.mrb[0].mxu0
        %v631 = vadd.f32 %v546, %v630
        %v632 = vpop.f32.mrb[0].mxu0
        %v633 = vpop.f32.mrb[0].mxu0
        %v634 = vadd.f32 %v546, %v633
        %v635 = vpop.f32.mrb[0].mxu0
        %636 = vdwg.mxu0
        %v637 = vmul.f32 %v631, %v631
        %v638 = vmul.f32 %v634, %v634
        %639 = vadd.xlane.f32.xlu0 %v637
        %v640 = vpop.xlane.xlu0 %639
        %641 = vadd.xlane.f32.xlu0 %v638
        %v642 = vpop.xlane.xlu0 %641
        %v643 = vmax.f32 %v640, 1e-24
        %v644 = vmax.f32 %v642, 1e-24
        %v645 = vrsqrt.pop %v643
        %v646 = vrsqrt.pop %v644
        %v647 = vmul.f32 %v631, %v645
        %v648 = vmul.f32 %v634, %v646
        %v649 = vpack.c.bf16 %v648, %v647
        %v651 = vunpack.c.l.b16 %v649
        %v652 = vunpack.c.h.b16 %v649
        %v653 = vpack.c.b16 %v651, %v651
        %v654 = vpack.c.b16 %v652, %v652
        %657 = vst [vmem:[%s398] sm:$0xf] %v653
        %658 = vst [vmem:[%s398 + $0x4] sm:$0xf] %v654
        %s659 = sand.u32 %s180, 1
        %s660 = scalar_lea.sflag [#allocation4], %s659
        %s661 = sand.u32 %s180, 1
        %s662 = smul.addr %s661, 8
        %s663 = scalar_lea.vmem [#allocation11], %s662
        // Predicated region
        $region61: #{tpu_custom_call.1} parent=39 // pred_check
          %p664 = pneg %p190
        $region62: #{tpu_custom_call.1} parent=39 // pred_check_branch
          %666 = sbr.rel (%p664) target = $region64
        $region63: #{tpu_custom_call.1} parent=39 // pred_region
          %s667 = smul.u32 2, %s33
          %s669 = ssub.s32 128, 128
          %670 = vsyncadd %s660, %s669
          %s671 = smul.addr %s32, 4
          %s672 = sadd.s32 %s667, %s671
          %s673 = smul.addr %s672, 64
          %s674 = scalar_lea.hbm %s5, %s673
          %s675 = sshll.u32 %s663, 4
          %s676 = int_to_ptr.vmem [resolvable:$true] %s675
          %681 = dma.vmem_to_hbm [thread:$0]  %s676, 128, %s674, %s660, 64, 64, 4
        $region64: #{tpu_custom_call.1} parent=39 // pred_fallthru
          _
      $region40: #{tpu_custom_call.1} parent=5 // pred_fallthru
        _
      %p682 = scmp.le.s32.totalorder 2, %s23
      // Predicated region
      $region65: #{tpu_custom_call.1} parent=5 // pred_check
        %p683 = pneg %p682
      $region66: #{tpu_custom_call.1} parent=5 // pred_check_branch
        %685 = sbr.rel (%p683) target = $region68
      $region67: #{tpu_custom_call.1} parent=5 // pred_region
        %s686 = ssub.s32 %s23, 2
        // Predicated region
        $region69: #{tpu_custom_call.1} parent=67 // pred_check
          %p687 = pneg %p196
        $region70: #{tpu_custom_call.1} parent=67 // pred_check_branch
          %689 = sbr.rel (%p687) target = $region72
        $region71: #{tpu_custom_call.1} parent=67 // pred_region
          %s690 = sand.u32 %s181, 1
          %s691 = scalar_lea.sflag [#allocation4], %s690
          %s692 = sand.u32 %s181, 1
          %s693 = smul.addr %s692, 8
          %s694 = scalar_lea.vmem [#allocation11], %s693
          %695 = dma.done %s691, 128
        $region72: #{tpu_custom_call.1} parent=67 // pred_fallthru
          _
      $region68: #{tpu_custom_call.1} parent=5 // pred_fallthru
        _
    $region6: #{tpu_custom_call.1} parent=1 // loop_footer
      %s27 = sadd.s32 1, %s23
    $region7: #{tpu_custom_call.1} parent=1 // loop_footer_branch
      %22 = sbr.rel target = $region3
    $region8: #{tpu_custom_call.1} parent=1 // loop_exit
      _
    %696 = vsyncpa [#allocation3], 1
    %s697 = scalar_lea.sflag [#allocation3], 1
    %698 = vsyncpa %s697, 1
    %699 = vsyncpa [#allocation6], 1
    %s700 = scalar_lea.sflag [#allocation6], 1
    %701 = vsyncpa %s700, 1
    %702 = vsyncpa [#allocation9], 1
    %s703 = scalar_lea.sflag [#allocation9], 1
    %704 = vsyncpa %s703, 1
    %705 = vsyncpa [#allocation4], 1
    %s706 = scalar_lea.sflag [#allocation4], 1
    %707 = vsyncpa %s706, 1

</llo_original>
